<compile_context>
chip_gen: v7x
topology: tpu7x:2x2x1
jax: 0.10.0
libtpu: 0.0.40
codegen_flags: <defaults>
</compile_context>

<pallas_src>
import functools

import jax
import jax.numpy as jnp
from jax.experimental import pallas as pl
from jax.experimental.pallas import tpu as pltpu


# nn.Parameter(torch.tensor([1.5, 1.2, 1.2, 0.8, 0.8, 0.8, 0.8, 0.8]))
COEFF_WEIGHTS = (1.5, 1.2, 1.2, 0.8, 0.8, 0.8, 0.8, 0.8)


def _bf16_pairwise_ok():
    """bf16 elementwise is native on v6e / v7x VALUs; not on v5e and older."""
    try:
        kind = jax.devices()[0].device_kind.lower()
    except Exception:
        return False
    return any(tag in kind for tag in ("v6", "v7", "6e", "7x"))


def _make_kernel(B, K, cw, dist_thr, diversity_weight, inv_spread_factor,
                 use_mxu, pair_dtype):
    """Builds the Pallas kernel body.  Static config closed over as Python floats."""
    inv_B = 1.0 / float(B)
    inv_BK = 1.0 / float(B * K)
    inv_K = 1.0 / float(K)
    bm1 = float(B - 1)                     # B == 1 -> div by 0 (matches torch.std NaN)
    # diagonal of the pairwise similarity mask is True iff the threshold is > 0
    diag_self = 1.0 if dist_thr > 0.0 else 0.0

    def _sum_all(x):                       # full reduction kept 2-D -> (1, 1)
        return jnp.sum(jnp.sum(x, axis=1, keepdims=True), axis=0, keepdims=True)

    def kernel(cfg_ref, pred_kb_ref, target_kb_ref, pred_bk_ref, target_bk_ref,
               out_ref):
        # runtime scalars (SMEM) -- no recompile across epochs
        use_warmup = cfg_ref[0]            # 1.0 if (training and epoch < warm_up)
        min_mag = cfg_ref[1]               # 0.8 * (1 - epoch / warm_up_epochs)
        spread_weight = cfg_ref[2]         # spread_factor * min(1, epoch / 20)

        pred_kb = pred_kb_ref[...]         # (K, B) lane-dense
        cd = jnp.abs(pred_kb)              # |pred|, shared by both paths

        # ---------------- warm-up constraint path (O(B*K), gated) ----------------
        @pl.when(use_warmup > 0.5)
        def _warmup():
            outside_zero = jnp.maximum(min_mag - cd, 0.0)            # (K, B)
            outside_range = jnp.maximum(cd - 1.0, 0.0)               # (K, B)
            max_vals = jnp.max(pred_kb, axis=1, keepdims=True)       # (K, 1)
            min_vals = jnp.min(pred_kb, axis=1, keepdims=True)       # (K, 1)
            range_cov = (jnp.maximum(0.5 - max_vals, 0.0)
                         + jnp.maximum(min_vals + 0.5, 0.0))         # (K, 1)
            zcl = 10.0 * (outside_zero + outside_range) + 5.0 * range_cov
            total = _sum_all(zcl) * (inv_BK * 100.0)                 # (1, 1)
            out_ref[...] = total.astype(jnp.float32)

        # ---------------- main path: base + diversity + spread (gated) -----------
        @pl.when(use_warmup <= 0.5)
        def _main():
            target_kb = target_kb_ref[...]                           # (K, B)
            diff_kb = jnp.abs(pred_kb - target_kb)

            # saturated base loss (lane-dense)
            saturated_diff = jnp.minimum(diff_kb, 0.2)
            in_edge = jnp.logical_and(cd >= 0.8, cd <= 1.0)
            edge_pos = (cd - 0.8) * 5.0                              # (cd - 0.8) / 0.2
            edge_correction = jnp.where(in_edge, -0.0099 * edge_pos * edge_pos, 0.0)
            out_of_range = jnp.maximum(cd - 1.0, 0.0)
            base_loss = saturated_diff + edge_correction + out_of_range * out_of_range

            # per-coefficient weights: compile-time where-chain over a (K,1) iota,
            # applied as ONE broadcasted multiply (no K sublane-sparse partials)
            kidx = jax.lax.broadcasted_iota(jnp.int32, (K, 1), 0)
            cw_col = jnp.full((K, 1), cw[0], dtype=jnp.float32)
            for k in range(1, K):
                cw_col = jnp.where(kidx == k, cw[k], cw_col)
            weighted_base_loss = _sum_all(base_loss * cw_col) * inv_BK     # (1, 1)

            # spread loss (one-pass unbiased variance over the batch axis)
            s1 = jnp.sum(pred_kb, axis=1, keepdims=True)                   # (K, 1)
            s2 = jnp.sum(pred_kb * pred_kb, axis=1, keepdims=True)         # (K, 1)
            var = jnp.maximum(s2 - s1 * s1 * inv_B, 0.0) / bm1
            pred_std = jnp.sum(jnp.sqrt(var), axis=0, keepdims=True) * inv_K   # (1,1)
            spread_loss = jnp.exp(-pred_std * inv_spread_factor)               # (1,1)

            # diversity penalty: masked pairwise L1 over the batch
            pred_bk = pred_bk_ref[...]                                 # (B, K)
            target_bk = target_bk_ref[...]                             # (B, K)
            nc_col = jnp.max(
                jnp.where(jnp.abs(pred_bk - target_bk) >= 0.2, 1.0, 0.0),
                axis=1, keepdims=True)                                 # (B, 1) "not close"
            n_nc = jnp.sum(nc_col, axis=0, keepdims=True)              # (1, 1)

            # pairwise L1 distance accumulated over K -- one live (B,B) buffer,
            # in bf16 on bf16-capable chips at large B, f32 otherwise.
            pbk = pred_bk.astype(pair_dtype)
            pkb = pred_kb.astype(pair_dtype)
            dist = jnp.abs(pbk[:, 0:1] - pkb[0:1, :])                  # (B, B)
            for k in range(1, K):
                dist = dist + jnp.abs(pbk[:, k:k + 1] - pkb[k:k + 1, :])
            # temperature folded into the static threshold (dist/T < thr*K)
            too_similar = dist < dist_thr                              # (B, B) bool

            if use_mxu:
                # fold the nc_j column mask into an MXU matvec; 0/1 is exact in
                # bf16 and guarantees a single-pass native matmul, f32 accumulate
                counts_wd = jnp.dot(too_similar.astype(jnp.bfloat16),
                                    nc_col.astype(jnp.bfloat16),
                                    preferred_element_type=jnp.float32)  # (B, 1)
            else:
                nc_row = jnp.max(jnp.where(diff_kb >= 0.2, 1.0, 0.0),
                                 axis=0, keepdims=True)                # (1, B)
                counts_wd = jnp.sum(jnp.where(too_similar, nc_row, 0.0),
                                    axis=1, keepdims=True)             # (B, 1)

            # remove the self pair (diagonal); counts is 0 for "close" rows
            counts = nc_col * (counts_wd - nc_col * diag_self)         # (B, 1)
            penalty = jnp.exp(counts * inv_B) - 1.0                    # 0 where counts==0
            diversity_loss = jnp.sum(penalty, axis=0, keepdims=True) * inv_B   # (1, 1)
            mean_counts = (jnp.sum(counts, axis=0, keepdims=True)
                           / jnp.maximum(n_nc, 1.0))                   # (1, 1)
            current_weight = diversity_weight * (1.0 - jnp.exp(-mean_counts))
            # degenerate cases (n_nc <= 1, or every row "close") naturally give a
            # zero diversity contribution, matching the PyTorch subset logic.

            total = (weighted_base_loss
                     + current_weight * diversity_loss
                     + spread_weight * spread_loss)                    # (1, 1)
            out_ref[...] = total.astype(jnp.float32)

        # TODO(synk): the 1%-probability torch.rand(...) debug print is a pure
        # host-side side effect with no Pallas equivalent and is dropped.

    return kernel


@functools.lru_cache(maxsize=None)
def _build_loss_fn(B, K, similarity_threshold, diversity_weight, temperature,
                   spread_factor):
    """Builds (and caches) the pallas_call callable for a static shape/config."""
    if K == 1:
        cw = (1.0,)
    else:
        cw = tuple(float(w) for w in COEFF_WEIGHTS[:K])
    # torch compares (dist / temperature) < threshold * K  ->  fold statically
    dist_thr = float(similarity_threshold) * float(K) * float(temperature)

    use_mxu = B >= 256                       # slot arbitration only (see review)
    use_bf16 = _bf16_pairwise_ok() and B >= 256
    pair_dtype = jnp.bfloat16 if use_bf16 else jnp.float32

    kernel = _make_kernel(B, K, cw, dist_thr,
                          diversity_weight=float(diversity_weight),
                          inv_spread_factor=1.0 / float(spread_factor),
                          use_mxu=use_mxu, pair_dtype=pair_dtype)

    # capacity-aware VMEM limit (v7x: 64 MiB/core; v5e/v6e: 128 MiB)
    try:
        vmem_cap = int(pltpu.get_tpu_info().vmem_capacity_bytes)
    except Exception:
        vmem_cap = 64 * 1024 * 1024
    pair_bytes = 2 if use_bf16 else 4
    est = 4 * B * B * pair_bytes + 16 * B * K * 4 + (2 << 20)
    vmem_limit = int(max(16 * 1024 * 1024, min(int(vmem_cap * 0.8), est)))

    return pl.pallas_call(
        kernel,
        out_shape=jax.ShapeDtypeStruct((1, 1), jnp.float32),
        in_specs=[
            pl.BlockSpec(memory_space=pltpu.MemorySpace.SMEM),   # cfg scalars (3,)
            pl.BlockSpec(memory_space=pltpu.MemorySpace.VMEM),   # pred   (K, B)
            pl.BlockSpec(memory_space=pltpu.MemorySpace.VMEM),   # target (K, B)
            pl.BlockSpec(memory_space=pltpu.MemorySpace.VMEM),   # pred   (B, K)
            pl.BlockSpec(memory_space=pltpu.MemorySpace.VMEM),   # target (B, K)
        ],
        out_specs=pl.BlockSpec(memory_space=pltpu.MemorySpace.VMEM),
        compiler_params=pltpu.CompilerParams(vmem_limit_bytes=vmem_limit),
    )


def phase_aware_loss(pred, target, *, is_training=False, epoch=0,
                     warm_up_epochs=5, similarity_threshold=0.1,
                     diversity_weight=0.1, temperature=1.0, spread_factor=0.3):
    pred = jnp.asarray(pred, jnp.float32)
    target = jnp.asarray(target, jnp.float32)
    if pred.ndim == 1:
        pred = pred[:, None]
    if target.ndim == 1:
        target = target[:, None]
    B, K = pred.shape

    fn = _build_loss_fn(B, K, float(similarity_threshold),
                        float(diversity_weight), float(temperature),
                        float(spread_factor))

    # epoch / is_training dependent scalars are runtime SMEM inputs (no recompile)
    use_warmup = 1.0 if (bool(is_training) and epoch < warm_up_epochs) else 0.0
    if warm_up_epochs > 0:
        min_mag = 0.8 * (1.0 - float(epoch) / float(warm_up_epochs))
    else:
        min_mag = 0.0
    spread_weight = float(spread_factor) * min(1.0, float(epoch) / 20.0)
    cfg = jnp.array([use_warmup, min_mag, spread_weight], dtype=jnp.float32)

    # host-side layout plumbing: lane-dense (K, B) view + original (B, K)
    out = fn(cfg, pred.T, target.T, pred, target)
    return out[0, 0]


if __name__ == "__main__":
    key = jax.random.PRNGKey(0)
    kp, kt = jax.random.split(key)
    B, K = 8, 8
    # deliberately spread beyond [-1, 1] so the edge-correction / range-penalty
    # branches of the saturated loss are exercised
    pred = jax.random.uniform(kp, (B, K), jnp.float32, minval=-1.2, maxval=1.2)
    target = jax.random.uniform(kt, (B, K), jnp.float32, minval=-1.0, maxval=1.0)

    # main (eval) path: base + diversity + spread losses
    loss_eval = phase_aware_loss(pred, target, is_training=False, epoch=0)
    # warm-up (training) path: constraint loss only (same compiled kernel, new cfg)
    loss_warm = phase_aware_loss(pred, target, is_training=True, epoch=1,
                                 warm_up_epochs=5)

    jax.block_until_ready(loss_eval)
    jax.block_until_ready(loss_warm)
    print("KERNEL_OK")
</pallas_src>

<mosaic_0001>
module attributes {stable_mosaic.version = 11 : i64} {
  func.func @kernel(%arg0: memref<3xf32, #tpu.memory_space<smem>>, %arg1: memref<8x8xf32, #tpu.memory_space<vmem>>, %arg2: memref<8x8xf32, #tpu.memory_space<vmem>>, %arg3: memref<8x8xf32, #tpu.memory_space<vmem>>, %arg4: memref<8x8xf32, #tpu.memory_space<vmem>>, %arg5: memref<1x1xf32, #tpu.memory_space<vmem>>) attributes {dimension_semantics = [], scalar_prefetch = 0 : i64, scratch_operands = 0 : i64, tpu.core_type = #tpu.core_type<tc>} {
    %c0 = arith.constant 0 : index
    %0 = memref.load %arg0[%c0] : memref<3xf32, #tpu.memory_space<smem>>
    %c1 = arith.constant 1 : index
    %1 = memref.load %arg0[%c1] : memref<3xf32, #tpu.memory_space<smem>>
    %c2 = arith.constant 2 : index
    %2 = memref.load %arg0[%c2] : memref<3xf32, #tpu.memory_space<smem>>
    %c0_0 = arith.constant 0 : index
    %c0_1 = arith.constant 0 : index
    %3 = vector.load %arg1[%c0_0, %c0_1] : memref<8x8xf32, #tpu.memory_space<vmem>>, vector<8x8xf32>
    %4 = math.absf %3 : vector<8x8xf32>
    %cst = arith.constant 5.000000e-01 : f32
    %5 = arith.cmpf ogt, %0, %cst : f32
    %6 = arith.extui %5 : i1 to i32
    %c0_i32 = arith.constant 0 : i32
    %7 = arith.cmpi ne, %6, %c0_i32 : i32
    scf.if %7 {
      %11 = vector.broadcast %1 : f32 to vector<8x8xf32>
      %12 = arith.subf %11, %4 : vector<8x8xf32>
      %cst_4 = arith.constant 0.000000e+00 : f32
      %13 = vector.broadcast %cst_4 : f32 to vector<8x8xf32>
      %14 = arith.maximumf %12, %13 : vector<8x8xf32>
      %cst_5 = arith.constant 1.000000e+00 : f32
      %15 = vector.broadcast %cst_5 : f32 to vector<8x8xf32>
      %16 = arith.subf %4, %15 : vector<8x8xf32>
      %cst_6 = arith.constant 0.000000e+00 : f32
      %17 = vector.broadcast %cst_6 : f32 to vector<8x8xf32>
      %18 = arith.maximumf %16, %17 : vector<8x8xf32>
      %cst_7 = arith.constant dense<0xFF800000> : vector<8xf32>
      %19 = vector.multi_reduction <maximumf>, %3, %cst_7 [1] : vector<8x8xf32> to vector<8xf32>
      %20 = vector.shape_cast %19 : vector<8xf32> to vector<8x1xf32>
      %cst_8 = arith.constant dense<0x7F800000> : vector<8xf32>
      %21 = vector.multi_reduction <minimumf>, %3, %cst_8 [1] : vector<8x8xf32> to vector<8xf32>
      %22 = vector.shape_cast %21 : vector<8xf32> to vector<8x1xf32>
      %cst_9 = arith.constant 5.000000e-01 : f32
      %23 = vector.broadcast %cst_9 : f32 to vector<8x1xf32>
      %24 = arith.subf %23, %20 : vector<8x1xf32>
      %cst_10 = arith.constant 0.000000e+00 : f32
      %25 = vector.broadcast %cst_10 : f32 to vector<8x1xf32>
      %26 = arith.maximumf %24, %25 : vector<8x1xf32>
      %cst_11 = arith.constant 5.000000e-01 : f32
      %27 = vector.broadcast %cst_11 : f32 to vector<8x1xf32>
      %28 = arith.addf %22, %27 : vector<8x1xf32>
      %cst_12 = arith.constant 0.000000e+00 : f32
      %29 = vector.broadcast %cst_12 : f32 to vector<8x1xf32>
      %30 = arith.maximumf %28, %29 : vector<8x1xf32>
      %31 = arith.addf %26, %30 : vector<8x1xf32>
      %32 = arith.addf %14, %18 : vector<8x8xf32>
      %cst_13 = arith.constant 1.000000e+01 : f32
      %33 = vector.broadcast %cst_13 : f32 to vector<8x8xf32>
      %34 = arith.mulf %33, %32 : vector<8x8xf32>
      %cst_14 = arith.constant 5.000000e+00 : f32
      %35 = vector.broadcast %cst_14 : f32 to vector<8x1xf32>
      %36 = arith.mulf %35, %31 : vector<8x1xf32>
      %37 = vector.broadcast %36 : vector<8x1xf32> to vector<8x8xf32>
      %38 = arith.addf %34, %37 : vector<8x8xf32>
      %cst_15 = arith.constant dense<0.000000e+00> : vector<8xf32>
      %39 = vector.multi_reduction <add>, %38, %cst_15 [1] : vector<8x8xf32> to vector<8xf32>
      %40 = vector.shape_cast %39 : vector<8xf32> to vector<8x1xf32>
      %cst_16 = arith.constant dense<0.000000e+00> : vector<1xf32>
      %41 = vector.multi_reduction <add>, %40, %cst_16 [0] : vector<8x1xf32> to vector<1xf32>
      %42 = vector.shape_cast %41 : vector<1xf32> to vector<1x1xf32>
      %cst_17 = arith.constant 1.562500e+00 : f32
      %43 = vector.broadcast %cst_17 : f32 to vector<1x1xf32>
      %44 = arith.mulf %42, %43 : vector<1x1xf32>
      %c0_18 = arith.constant 0 : index
      %c0_19 = arith.constant 0 : index
      %45 = vector.load %arg5[%c0_18, %c0_19] : memref<1x1xf32, #tpu.memory_space<vmem>>, vector<1x1xf32>
      tpu.vector_store %arg5[%c0_18, %c0_19], %44 {strides = array<i32>} : memref<1x1xf32, #tpu.memory_space<vmem>>, vector<1x1xf32>,
    } else {
    }
    %cst_2 = arith.constant 5.000000e-01 : f32
    %8 = arith.cmpf ole, %0, %cst_2 : f32
    %9 = arith.extui %8 : i1 to i32
    %c0_i32_3 = arith.constant 0 : i32
    %10 = arith.cmpi ne, %9, %c0_i32_3 : i32
    scf.if %10 {
      %c0_4 = arith.constant 0 : index
      %c0_5 = arith.constant 0 : index
      %11 = vector.load %arg2[%c0_4, %c0_5] : memref<8x8xf32, #tpu.memory_space<vmem>>, vector<8x8xf32>
      %12 = arith.subf %3, %11 : vector<8x8xf32>
      %13 = math.absf %12 : vector<8x8xf32>
      %cst_6 = arith.constant 2.000000e-01 : f32
      %14 = vector.broadcast %cst_6 : f32 to vector<8x8xf32>
      %15 = arith.minimumf %13, %14 : vector<8x8xf32>
      %cst_7 = arith.constant 8.000000e-01 : f32
      %16 = vector.broadcast %cst_7 : f32 to vector<8x8xf32>
      %17 = arith.cmpf oge, %4, %16 : vector<8x8xf32>
      %cst_8 = arith.constant 1.000000e+00 : f32
      %18 = vector.broadcast %cst_8 : f32 to vector<8x8xf32>
      %19 = arith.cmpf ole, %4, %18 : vector<8x8xf32>
      %20 = arith.andi %17, %19 : vector<8x8xi1>
      %cst_9 = arith.constant 8.000000e-01 : f32
      %21 = vector.broadcast %cst_9 : f32 to vector<8x8xf32>
      %22 = arith.subf %4, %21 : vector<8x8xf32>
      %cst_10 = arith.constant 5.000000e+00 : f32
      %23 = vector.broadcast %cst_10 : f32 to vector<8x8xf32>
      %24 = arith.mulf %22, %23 : vector<8x8xf32>
      %cst_11 = arith.constant -0.00989999994 : f32
      %25 = vector.broadcast %cst_11 : f32 to vector<8x8xf32>
      %26 = arith.mulf %25, %24 : vector<8x8xf32>
      %27 = arith.mulf %26, %24 : vector<8x8xf32>
      %cst_12 = arith.constant 0.000000e+00 : f32
      %28 = vector.broadcast %cst_12 : f32 to vector<8x8xf32>
      %29 = arith.select %20, %27, %28 : vector<8x8xi1>, vector<8x8xf32>
      %cst_13 = arith.constant 1.000000e+00 : f32
      %30 = vector.broadcast %cst_13 : f32 to vector<8x8xf32>
      %31 = arith.subf %4, %30 : vector<8x8xf32>
      %cst_14 = arith.constant 0.000000e+00 : f32
      %32 = vector.broadcast %cst_14 : f32 to vector<8x8xf32>
      %33 = arith.maximumf %31, %32 : vector<8x8xf32>
      %34 = arith.addf %15, %29 : vector<8x8xf32>
      %35 = arith.mulf %33, %33 : vector<8x8xf32>
      %36 = arith.addf %34, %35 : vector<8x8xf32>
      %37 = tpu.iota {dimensions = array<i32: 0>} : vector<8x1xi32>
      %cst_15 = arith.constant 1.500000e+00 : f32
      %38 = vector.broadcast %cst_15 : f32 to vector<8x1xf32>
      %c1_i32 = arith.constant 1 : i32
      %39 = vector.broadcast %c1_i32 : i32 to vector<8x1xi32>
      %40 = arith.cmpi eq, %37, %39 : vector<8x1xi32>
      %cst_16 = arith.constant 1.200000e+00 : f32
      %41 = vector.broadcast %cst_16 : f32 to vector<8x1xf32>
      %42 = arith.select %40, %41, %38 : vector<8x1xi1>, vector<8x1xf32>
      %c2_i32 = arith.constant 2 : i32
      %43 = vector.broadcast %c2_i32 : i32 to vector<8x1xi32>
      %44 = arith.cmpi eq, %37, %43 : vector<8x1xi32>
      %cst_17 = arith.constant 1.200000e+00 : f32
      %45 = vector.broadcast %cst_17 : f32 to vector<8x1xf32>
      %46 = arith.select %44, %45, %42 : vector<8x1xi1>, vector<8x1xf32>
      %c3_i32 = arith.constant 3 : i32
      %47 = vector.broadcast %c3_i32 : i32 to vector<8x1xi32>
      %48 = arith.cmpi eq, %37, %47 : vector<8x1xi32>
      %cst_18 = arith.constant 8.000000e-01 : f32
      %49 = vector.broadcast %cst_18 : f32 to vector<8x1xf32>
      %50 = arith.select %48, %49, %46 : vector<8x1xi1>, vector<8x1xf32>
      %c4_i32 = arith.constant 4 : i32
      %51 = vector.broadcast %c4_i32 : i32 to vector<8x1xi32>
      %52 = arith.cmpi eq, %37, %51 : vector<8x1xi32>
      %cst_19 = arith.constant 8.000000e-01 : f32
      %53 = vector.broadcast %cst_19 : f32 to vector<8x1xf32>
      %54 = arith.select %52, %53, %50 : vector<8x1xi1>, vector<8x1xf32>
      %c5_i32 = arith.constant 5 : i32
      %55 = vector.broadcast %c5_i32 : i32 to vector<8x1xi32>
      %56 = arith.cmpi eq, %37, %55 : vector<8x1xi32>
      %cst_20 = arith.constant 8.000000e-01 : f32
      %57 = vector.broadcast %cst_20 : f32 to vector<8x1xf32>
      %58 = arith.select %56, %57, %54 : vector<8x1xi1>, vector<8x1xf32>
      %c6_i32 = arith.constant 6 : i32
      %59 = vector.broadcast %c6_i32 : i32 to vector<8x1xi32>
      %60 = arith.cmpi eq, %37, %59 : vector<8x1xi32>
      %cst_21 = arith.constant 8.000000e-01 : f32
      %61 = vector.broadcast %cst_21 : f32 to vector<8x1xf32>
      %62 = arith.select %60, %61, %58 : vector<8x1xi1>, vector<8x1xf32>
      %c7_i32 = arith.constant 7 : i32
      %63 = vector.broadcast %c7_i32 : i32 to vector<8x1xi32>
      %64 = arith.cmpi eq, %37, %63 : vector<8x1xi32>
      %cst_22 = arith.constant 8.000000e-01 : f32
      %65 = vector.broadcast %cst_22 : f32 to vector<8x1xf32>
      %66 = arith.select %64, %65, %62 : vector<8x1xi1>, vector<8x1xf32>
      %67 = vector.broadcast %66 : vector<8x1xf32> to vector<8x8xf32>
      %68 = arith.mulf %36, %67 : vector<8x8xf32>
      %cst_23 = arith.constant dense<0.000000e+00> : vector<8xf32>
      %69 = vector.multi_reduction <add>, %68, %cst_23 [1] : vector<8x8xf32> to vector<8xf32>
      %70 = vector.shape_cast %69 : vector<8xf32> to vector<8x1xf32>
      %cst_24 = arith.constant dense<0.000000e+00> : vector<1xf32>
      %71 = vector.multi_reduction <add>, %70, %cst_24 [0] : vector<8x1xf32> to vector<1xf32>
      %72 = vector.shape_cast %71 : vector<1xf32> to vector<1x1xf32>
      %cst_25 = arith.constant 1.562500e-02 : f32
      %73 = vector.broadcast %cst_25 : f32 to vector<1x1xf32>
      %74 = arith.mulf %72, %73 : vector<1x1xf32>
      %cst_26 = arith.constant dense<0.000000e+00> : vector<8xf32>
      %75 = vector.multi_reduction <add>, %3, %cst_26 [1] : vector<8x8xf32> to vector<8xf32>
      %76 = vector.shape_cast %75 : vector<8xf32> to vector<8x1xf32>
      %77 = arith.mulf %3, %3 : vector<8x8xf32>
      %cst_27 = arith.constant dense<0.000000e+00> : vector<8xf32>
      %78 = vector.multi_reduction <add>, %77, %cst_27 [1] : vector<8x8xf32> to vector<8xf32>
      %79 = vector.shape_cast %78 : vector<8xf32> to vector<8x1xf32>
      %80 = arith.mulf %76, %76 : vector<8x1xf32>
      %cst_28 = arith.constant 1.250000e-01 : f32
      %81 = vector.broadcast %cst_28 : f32 to vector<8x1xf32>
      %82 = arith.mulf %80, %81 : vector<8x1xf32>
      %83 = arith.subf %79, %82 : vector<8x1xf32>
      %cst_29 = arith.constant 0.000000e+00 : f32
      %84 = vector.broadcast %cst_29 : f32 to vector<8x1xf32>
      %85 = arith.maximumf %83, %84 : vector<8x1xf32>
      %cst_30 = arith.constant 7.000000e+00 : f32
      %86 = vector.broadcast %cst_30 : f32 to vector<8x1xf32>
      %87 = arith.divf %85, %86 : vector<8x1xf32>
      %88 = math.sqrt %87 : vector<8x1xf32>
      %cst_31 = arith.constant dense<0.000000e+00> : vector<1xf32>
      %89 = vector.multi_reduction <add>, %88, %cst_31 [0] : vector<8x1xf32> to vector<1xf32>
      %90 = vector.shape_cast %89 : vector<1xf32> to vector<1x1xf32>
      %cst_32 = arith.constant 1.250000e-01 : f32
      %91 = vector.broadcast %cst_32 : f32 to vector<1x1xf32>
      %92 = arith.mulf %90, %91 : vector<1x1xf32>
      %cst_33 = arith.constant 0.000000e+00 : f32
      %93 = vector.broadcast %cst_33 : f32 to vector<1x1xf32>
      %94 = arith.subf %93, %92 : vector<1x1xf32>
      %cst_34 = arith.constant 3.33333325 : f32
      %95 = vector.broadcast %cst_34 : f32 to vector<1x1xf32>
      %96 = arith.mulf %94, %95 : vector<1x1xf32>
      %97 = math.exp %96 : vector<1x1xf32>
      %c0_35 = arith.constant 0 : index
      %c0_36 = arith.constant 0 : index
      %98 = vector.load %arg3[%c0_35, %c0_36] : memref<8x8xf32, #tpu.memory_space<vmem>>, vector<8x8xf32>
      %c0_37 = arith.constant 0 : index
      %c0_38 = arith.constant 0 : index
      %99 = vector.load %arg4[%c0_37, %c0_38] : memref<8x8xf32, #tpu.memory_space<vmem>>, vector<8x8xf32>
      %100 = arith.subf %98, %99 : vector<8x8xf32>
      %101 = math.absf %100 : vector<8x8xf32>
      %cst_39 = arith.constant 2.000000e-01 : f32
      %102 = vector.broadcast %cst_39 : f32 to vector<8x8xf32>
      %103 = arith.cmpf oge, %101, %102 : vector<8x8xf32>
      %cst_40 = arith.constant 1.000000e+00 : f32
      %cst_41 = arith.constant 0.000000e+00 : f32
      %104 = vector.broadcast %cst_40 : f32 to vector<8x8xf32>
      %105 = vector.broadcast %cst_41 : f32 to vector<8x8xf32>
      %106 = arith.select %103, %104, %105 : vector<8x8xi1>, vector<8x8xf32>
      %cst_42 = arith.constant dense<0xFF800000> : vector<8xf32>
      %107 = vector.multi_reduction <maximumf>, %106, %cst_42 [1] : vector<8x8xf32> to vector<8xf32>
      %108 = vector.shape_cast %107 : vector<8xf32> to vector<8x1xf32>
      %cst_43 = arith.constant dense<0.000000e+00> : vector<1xf32>
      %109 = vector.multi_reduction <add>, %108, %cst_43 [0] : vector<8x1xf32> to vector<1xf32>
      %110 = vector.shape_cast %109 : vector<1xf32> to vector<1x1xf32>
      %111 = vector.extract_strided_slice %98 {offsets = [0, 0], sizes = [8, 1], strides = [1, 1]} : vector<8x8xf32> to vector<8x1xf32>
      %112 = vector.extract_strided_slice %3 {offsets = [0, 0], sizes = [1, 8], strides = [1, 1]} : vector<8x8xf32> to vector<1x8xf32>
      %113 = vector.broadcast %111 : vector<8x1xf32> to vector<8x8xf32>
      %114 = vector.broadcast %112 : vector<1x8xf32> to vector<8x8xf32>
      %115 = arith.subf %113, %114 : vector<8x8xf32>
      %116 = math.absf %115 : vector<8x8xf32>
      %117 = vector.extract_strided_slice %98 {offsets = [0, 1], sizes = [8, 1], strides = [1, 1]} : vector<8x8xf32> to vector<8x1xf32>
      %118 = vector.extract_strided_slice %3 {offsets = [1, 0], sizes = [1, 8], strides = [1, 1]} : vector<8x8xf32> to vector<1x8xf32>
      %119 = vector.broadcast %117 : vector<8x1xf32> to vector<8x8xf32>
      %120 = vector.broadcast %118 : vector<1x8xf32> to vector<8x8xf32>
      %121 = arith.subf %119, %120 : vector<8x8xf32>
      %122 = math.absf %121 : vector<8x8xf32>
      %123 = arith.addf %116, %122 : vector<8x8xf32>
      %124 = vector.extract_strided_slice %98 {offsets = [0, 2], sizes = [8, 1], strides = [1, 1]} : vector<8x8xf32> to vector<8x1xf32>
      %125 = vector.extract_strided_slice %3 {offsets = [2, 0], sizes = [1, 8], strides = [1, 1]} : vector<8x8xf32> to vector<1x8xf32>
      %126 = vector.broadcast %124 : vector<8x1xf32> to vector<8x8xf32>
      %127 = vector.broadcast %125 : vector<1x8xf32> to vector<8x8xf32>
      %128 = arith.subf %126, %127 : vector<8x8xf32>
      %129 = math.absf %128 : vector<8x8xf32>
      %130 = arith.addf %123, %129 : vector<8x8xf32>
      %131 = vector.extract_strided_slice %98 {offsets = [0, 3], sizes = [8, 1], strides = [1, 1]} : vector<8x8xf32> to vector<8x1xf32>
      %132 = vector.extract_strided_slice %3 {offsets = [3, 0], sizes = [1, 8], strides = [1, 1]} : vector<8x8xf32> to vector<1x8xf32>
      %133 = vector.broadcast %131 : vector<8x1xf32> to vector<8x8xf32>
      %134 = vector.broadcast %132 : vector<1x8xf32> to vector<8x8xf32>
      %135 = arith.subf %133, %134 : vector<8x8xf32>
      %136 = math.absf %135 : vector<8x8xf32>
      %137 = arith.addf %130, %136 : vector<8x8xf32>
      %138 = vector.extract_strided_slice %98 {offsets = [0, 4], sizes = [8, 1], strides = [1, 1]} : vector<8x8xf32> to vector<8x1xf32>
      %139 = vector.extract_strided_slice %3 {offsets = [4, 0], sizes = [1, 8], strides = [1, 1]} : vector<8x8xf32> to vector<1x8xf32>
      %140 = vector.broadcast %138 : vector<8x1xf32> to vector<8x8xf32>
      %141 = vector.broadcast %139 : vector<1x8xf32> to vector<8x8xf32>
      %142 = arith.subf %140, %141 : vector<8x8xf32>
      %143 = math.absf %142 : vector<8x8xf32>
      %144 = arith.addf %137, %143 : vector<8x8xf32>
      %145 = vector.extract_strided_slice %98 {offsets = [0, 5], sizes = [8, 1], strides = [1, 1]} : vector<8x8xf32> to vector<8x1xf32>
      %146 = vector.extract_strided_slice %3 {offsets = [5, 0], sizes = [1, 8], strides = [1, 1]} : vector<8x8xf32> to vector<1x8xf32>
      %147 = vector.broadcast %145 : vector<8x1xf32> to vector<8x8xf32>
      %148 = vector.broadcast %146 : vector<1x8xf32> to vector<8x8xf32>
      %149 = arith.subf %147, %148 : vector<8x8xf32>
      %150 = math.absf %149 : vector<8x8xf32>
      %151 = arith.addf %144, %150 : vector<8x8xf32>
      %152 = vector.extract_strided_slice %98 {offsets = [0, 6], sizes = [8, 1], strides = [1, 1]} : vector<8x8xf32> to vector<8x1xf32>
      %153 = vector.extract_strided_slice %3 {offsets = [6, 0], sizes = [1, 8], strides = [1, 1]} : vector<8x8xf32> to vector<1x8xf32>
      %154 = vector.broadcast %152 : vector<8x1xf32> to vector<8x8xf32>
      %155 = vector.broadcast %153 : vector<1x8xf32> to vector<8x8xf32>
      %156 = arith.subf %154, %155 : vector<8x8xf32>
      %157 = math.absf %156 : vector<8x8xf32>
      %158 = arith.addf %151, %157 : vector<8x8xf32>
      %159 = vector.extract_strided_slice %98 {offsets = [0, 7], sizes = [8, 1], strides = [1, 1]} : vector<8x8xf32> to vector<8x1xf32>
      %160 = vector.extract_strided_slice %3 {offsets = [7, 0], sizes = [1, 8], strides = [1, 1]} : vector<8x8xf32> to vector<1x8xf32>
      %161 = vector.broadcast %159 : vector<8x1xf32> to vector<8x8xf32>
      %162 = vector.broadcast %160 : vector<1x8xf32> to vector<8x8xf32>
      %163 = arith.subf %161, %162 : vector<8x8xf32>
      %164 = math.absf %163 : vector<8x8xf32>
      %165 = arith.addf %158, %164 : vector<8x8xf32>
      %cst_44 = arith.constant 8.000000e-01 : f32
      %166 = vector.broadcast %cst_44 : f32 to vector<8x8xf32>
      %167 = arith.cmpf olt, %165, %166 : vector<8x8xf32>
      %cst_45 = arith.constant 2.000000e-01 : f32
      %168 = vector.broadcast %cst_45 : f32 to vector<8x8xf32>
      %169 = arith.cmpf oge, %13, %168 : vector<8x8xf32>
      %cst_46 = arith.constant 1.000000e+00 : f32
      %cst_47 = arith.constant 0.000000e+00 : f32
      %170 = vector.broadcast %cst_46 : f32 to vector<8x8xf32>
      %171 = vector.broadcast %cst_47 : f32 to vector<8x8xf32>
      %172 = arith.select %169, %170, %171 : vector<8x8xi1>, vector<8x8xf32>
      %cst_48 = arith.constant dense<0xFF800000> : vector<8xf32>
      %173 = vector.multi_reduction <maximumf>, %172, %cst_48 [0] : vector<8x8xf32> to vector<8xf32>
      %174 = vector.shape_cast %173 : vector<8xf32> to vector<1x8xf32>
      %cst_49 = arith.constant 0.000000e+00 : f32
      %175 = vector.shape_cast %174 : vector<1x8xf32> to vector<1x8xf32>
      %176 = vector.broadcast %175 : vector<1x8xf32> to vector<8x8xf32>
      %177 = vector.broadcast %cst_49 : f32 to vector<8x8xf32>
      %178 = arith.select %167, %176, %177 : vector<8x8xi1>, vector<8x8xf32>
      %cst_50 = arith.constant dense<0.000000e+00> : vector<8xf32>
      %179 = vector.multi_reduction <add>, %178, %cst_50 [1] : vector<8x8xf32> to vector<8xf32>
      %180 = vector.shape_cast %179 : vector<8xf32> to vector<8x1xf32>
      %cst_51 = arith.constant 1.000000e+00 : f32
      %181 = vector.broadcast %cst_51 : f32 to vector<8x1xf32>
      %182 = arith.mulf %108, %181 : vector<8x1xf32>
      %183 = arith.subf %180, %182 : vector<8x1xf32>
      %184 = arith.mulf %108, %183 : vector<8x1xf32>
      %cst_52 = arith.constant 1.250000e-01 : f32
      %185 = vector.broadcast %cst_52 : f32 to vector<8x1xf32>
      %186 = arith.mulf %184, %185 : vector<8x1xf32>
      %187 = math.exp %186 : vector<8x1xf32>
      %cst_53 = arith.constant 1.000000e+00 : f32
      %188 = vector.broadcast %cst_53 : f32 to vector<8x1xf32>
      %189 = arith.subf %187, %188 : vector<8x1xf32>
      %cst_54 = arith.constant dense<0.000000e+00> : vector<1xf32>
      %190 = vector.multi_reduction <add>, %189, %cst_54 [0] : vector<8x1xf32> to vector<1xf32>
      %191 = vector.shape_cast %190 : vector<1xf32> to vector<1x1xf32>
      %cst_55 = arith.constant 1.250000e-01 : f32
      %192 = vector.broadcast %cst_55 : f32 to vector<1x1xf32>
      %193 = arith.mulf %191, %192 : vector<1x1xf32>
      %cst_56 = arith.constant dense<0.000000e+00> : vector<1xf32>
      %194 = vector.multi_reduction <add>, %184, %cst_56 [0] : vector<8x1xf32> to vector<1xf32>
      %195 = vector.shape_cast %194 : vector<1xf32> to vector<1x1xf32>
      %cst_57 = arith.constant 1.000000e+00 : f32
      %196 = vector.broadcast %cst_57 : f32 to vector<1x1xf32>
      %197 = arith.maximumf %110, %196 : vector<1x1xf32>
      %198 = arith.divf %195, %197 : vector<1x1xf32>
      %cst_58 = arith.constant 0.000000e+00 : f32
      %199 = vector.broadcast %cst_58 : f32 to vector<1x1xf32>
      %200 = arith.subf %199, %198 : vector<1x1xf32>
      %201 = math.exp %200 : vector<1x1xf32>
      %cst_59 = arith.constant 1.000000e+00 : f32
      %202 = vector.broadcast %cst_59 : f32 to vector<1x1xf32>
      %203 = arith.subf %202, %201 : vector<1x1xf32>
      %cst_60 = arith.constant 1.000000e-01 : f32
      %204 = vector.broadcast %cst_60 : f32 to vector<1x1xf32>
      %205 = arith.mulf %204, %203 : vector<1x1xf32>
      %206 = arith.mulf %205, %193 : vector<1x1xf32>
      %207 = arith.addf %74, %206 : vector<1x1xf32>
      %208 = vector.broadcast %2 : f32 to vector<1x1xf32>
      %209 = arith.mulf %208, %97 : vector<1x1xf32>
      %210 = arith.addf %207, %209 : vector<1x1xf32>
      %c0_61 = arith.constant 0 : index
      %c0_62 = arith.constant 0 : index
      %211 = vector.load %arg5[%c0_61, %c0_62] : memref<1x1xf32, #tpu.memory_space<vmem>>, vector<1x1xf32>
      tpu.vector_store %arg5[%c0_61, %c0_62], %210 {strides = array<i32>} : memref<1x1xf32, #tpu.memory_space<vmem>>, vector<1x1xf32>,
    } else {
    }
    return
  }
}

</mosaic_0001>

<llo_original>
// kernel: tpu_custom_call.1
$region0: #{tpu_custom_call.1}
  #allocation0 [shape = 'u32[]', space=smem, size = 0x4, offset = 0x4, fixed_abs, tag = 'smem constant byte address 0x4 - core index']
  #allocation1 [shape = 'u32[144,128]{1,0:T(1,128)}', space=vmem, size = 0x12000, scoped, tag = 'internal scratch']
  %s0 = inlined_call_operand.hbm [shape: f32[3], index: 0, kind: input, shape index: {}]
  %s1 = inlined_call_operand.hbm [shape: f32[8,8], index: 1, kind: input, shape index: {}]
  %s2 = inlined_call_operand.hbm [shape: f32[8,8], index: 2, kind: input, shape index: {}]
  %s3 = inlined_call_operand.vmem [shape: f32[8,8], index: 3, kind: input, shape index: {}]
  %s4 = inlined_call_operand.hbm [shape: f32[8,8], index: 4, kind: input, shape index: {}]
  %s5 = inlined_call_operand.hbm [shape: f32[1,1], index: 5, kind: output, shape index: {}]
  %s6 = sld [smem:[#allocation0]]
  $region54: #{tpu_custom_call.1} parent=0
    _
  %s8 = ssub.s32 1, %s6
  %s9 = scalar_select 0, %s8, %s6
  $region1: #{tpu_custom_call.1} parent=0
    #allocation2 [shape = 'u8[512]{0}', space=smem, size = 0x200, scoped, tag = 'input window, operand 0, single buffered']
    #allocation3 [shape = 's32[1]{0}', space=sflag, size = 0x4, scoped, tag = 'scoped memory for tpu_custom_call.1']
    #allocation4 [shape = 's32[1]{0}', space=sflag, size = 0x4, scoped, tag = 'scoped memory for tpu_custom_call.1']
    #allocation5 [shape = 's32[1]{0}', space=sflag, size = 0x4, scoped, tag = 'scoped memory for tpu_custom_call.1']
    #allocation6 [shape = 'u8[4096]{0}', space=vmem, size = 0x1000, scoped, tag = 'input window, operand 1, single buffered']
    #allocation7 [shape = 'u8[4096]{0}', space=vmem, size = 0x1000, scoped, tag = 'input window, operand 2, single buffered']
    #allocation8 [shape = 's32[1]{0}', space=sflag, size = 0x4, scoped, tag = 'scoped memory for tpu_custom_call.1']
    #allocation9 [shape = 'u8[4096]{0}', space=vmem, size = 0x1000, scoped, tag = 'input window, operand 4, single buffered']
    #allocation10 [shape = 'u8[512]{0}', space=vmem, size = 0x400, scoped, tag = 'output window, operand 0, single buffered']
    %10 = vsyncpa [#allocation5], 0
    %11 = vsyncpa [#allocation3], 0
    %12 = vsyncpa [#allocation8], 0
    %13 = vsyncpa [#allocation4], 0
    // Predicated region
    $region2: #{tpu_custom_call.1} parent=1 // pred_check
      _
    $region3: #{tpu_custom_call.1} parent=1 // pred_check_branch
      %15 = sbr.rel (0) target = $region5
    $region4: #{tpu_custom_call.1} parent=1 // pred_region
      %s17 = ssub.s32 16, 16
      %18 = vsyncadd [#allocation5], %s17
      %21 = dma.hbm_to_smem %s0, 16, [#allocation2], [#allocation5]
    $region5: #{tpu_custom_call.1} parent=1 // pred_fallthru
      _
    // Predicated region
    $region6: #{tpu_custom_call.1} parent=1 // pred_check
      _
    $region7: #{tpu_custom_call.1} parent=1 // pred_check_branch
      %23 = sbr.rel (0) target = $region9
    $region8: #{tpu_custom_call.1} parent=1 // pred_region
      %s25 = ssub.s32 128, 128
      %26 = vsyncadd [#allocation3], %s25
      %s28 = sshll.u32 [#allocation6], 4
      %s29 = int_to_ptr.vmem [resolvable:$true] %s28
      %31 = dma.hbm_to_vmem [thread:$0]  %s1, 128, %s29, [#allocation3]
    $region9: #{tpu_custom_call.1} parent=1 // pred_fallthru
      _
    // Predicated region
    $region10: #{tpu_custom_call.1} parent=1 // pred_check
      _
    $region11: #{tpu_custom_call.1} parent=1 // pred_check_branch
      %33 = sbr.rel (0) target = $region13
    $region12: #{tpu_custom_call.1} parent=1 // pred_region
      %s35 = ssub.s32 128, 128
      %36 = vsyncadd [#allocation8], %s35
      %s38 = sshll.u32 [#allocation7], 4
      %s39 = int_to_ptr.vmem [resolvable:$true] %s38
      %41 = dma.hbm_to_vmem [thread:$0]  %s2, 128, %s39, [#allocation8]
    $region13: #{tpu_custom_call.1} parent=1 // pred_fallthru
      _
    // Predicated region
    $region14: #{tpu_custom_call.1} parent=1 // pred_check
      _
    $region15: #{tpu_custom_call.1} parent=1 // pred_check_branch
      %43 = sbr.rel (0) target = $region17
    $region16: #{tpu_custom_call.1} parent=1 // pred_region
      _
    $region17: #{tpu_custom_call.1} parent=1 // pred_fallthru
      _
    // Predicated region
    $region18: #{tpu_custom_call.1} parent=1 // pred_check
      _
    $region19: #{tpu_custom_call.1} parent=1 // pred_check_branch
      %45 = sbr.rel (0) target = $region21
    $region20: #{tpu_custom_call.1} parent=1 // pred_region
      %s47 = ssub.s32 128, 128
      %48 = vsyncadd [#allocation8], %s47
      %s50 = sshll.u32 [#allocation9], 4
      %s51 = int_to_ptr.vmem [resolvable:$true] %s50
      %53 = dma.hbm_to_vmem [thread:$0]  %s4, 128, %s51, [#allocation8]
    $region21: #{tpu_custom_call.1} parent=1 // pred_fallthru
      _
    // Predicated region
    $region22: #{tpu_custom_call.1} parent=1 // pred_check
      _
    $region23: #{tpu_custom_call.1} parent=1 // pred_check_branch
      %55 = sbr.rel (0) target = $region25
    $region24: #{tpu_custom_call.1} parent=1 // pred_region
      %56 = dma.done [#allocation5], 16
    $region25: #{tpu_custom_call.1} parent=1 // pred_fallthru
      _
    // Predicated region
    $region26: #{tpu_custom_call.1} parent=1 // pred_check
      _
    $region27: #{tpu_custom_call.1} parent=1 // pred_check_branch
      %58 = sbr.rel (0) target = $region29
    $region28: #{tpu_custom_call.1} parent=1 // pred_region
      %59 = dma.done [#allocation3], 128
    $region29: #{tpu_custom_call.1} parent=1 // pred_fallthru
      _
    // Predicated region
    $region30: #{tpu_custom_call.1} parent=1 // pred_check
      _
    $region31: #{tpu_custom_call.1} parent=1 // pred_check_branch
      %61 = sbr.rel (0) target = $region33
    $region32: #{tpu_custom_call.1} parent=1 // pred_region
      %62 = dma.done [#allocation8], 128
    $region33: #{tpu_custom_call.1} parent=1 // pred_fallthru
      _
    // Predicated region
    $region34: #{tpu_custom_call.1} parent=1 // pred_check
      _
    $region35: #{tpu_custom_call.1} parent=1 // pred_check_branch
      %64 = sbr.rel (0) target = $region37
    $region36: #{tpu_custom_call.1} parent=1 // pred_region
      %65 = dma.done [#allocation8], 128
    $region37: #{tpu_custom_call.1} parent=1 // pred_fallthru
      _
    %66 = sfence
    %s67 = sld [smem:[#allocation2]]
    %s68 = sld [smem:[#allocation2 + $0x1]]
    %s69 = sld [smem:[#allocation2 + $0x2]]
    %v70 = vld [vmem:[#allocation6] sm:$0xff]
    %v71 = vand.u32 2147483647, %v70
    %p72 = scmp.gt.f32.partialorder %s67, 0.5
    // Predicated region
    $region38: #{tpu_custom_call.1} parent=1 // pred_check
      %p73 = pneg %p72
    $region39: #{tpu_custom_call.1} parent=1 // pred_check_branch
      %75 = sbr.rel (%p73) target = $region41
    $region40: #{tpu_custom_call.1} parent=1 // pred_region
      %v76 = vstv %s68
      %v77 = vsub.f32 %v76, %v71
      %v78 = vmax.f32 %v77, 0.0
      %v79 = vsub.f32 %v71, 1.0
      %v80 = vmax.f32 %v79, 0.0
      %vm81 = vcmask 64512
      %v82 = vsel %vm81, %v70, -inf
      %83 = vmax.xlane.f32.xlu0 %v82
      %v84 = vpop.xlane.xlu0 %83
      %v85 = vsel %vm81, %v70, inf
      %86 = vmin.xlane.f32.xlu0 %v85
      %v87 = vpop.xlane.xlu0 %86
      %v88 = vsub.f32 0.5, %v84
      %v89 = vmax.f32 %v88, 0.0
      %v90 = vadd.f32 %v87, 0.5
      %v91 = vmax.f32 %v90, 0.0
      %v92 = vadd.f32 %v89, %v91
      %v93 = vadd.f32 %v78, %v80
      %v94 = vmul.f32 %v93, 10.0
      %v95 = vmul.f32 %v92, 5.0
      %v96 = vadd.f32 %v94, %v95
      %v97 = vsel %vm81, %v96, 0.0
      %98 = vadd.xlane.f32.xlu0 %v97
      %v99 = vpop.xlane.xlu0 %98
      %v100 = vrot.slane %v99, 4
      %v101 = vadd.f32 %v99, %v100
      %v102 = vrot.slane %v101, 2
      %v103 = vadd.f32 %v101, %v102
      %v104 = vrot.slane %v103, 1
      %v105 = vadd.f32 %v103, %v104
      %v106 = vmul.f32 %v105, 1.5625
      %vm107 = vcmask 0
      %108 = vst.msk [vmem:[#allocation10] sm:$0x1] %vm107, %v106
    $region41: #{tpu_custom_call.1} parent=1 // pred_fallthru
      _
    %p109 = scmp.le.f32.partialorder %s67, 0.5
    // Predicated region
    $region42: #{tpu_custom_call.1} parent=1 // pred_check
      %p110 = pneg %p109
    $region43: #{tpu_custom_call.1} parent=1 // pred_check_branch
      %112 = sbr.rel (%p110) target = $region45
    $region44: #{tpu_custom_call.1} parent=1 // pred_region
      %v113 = vld [vmem:[#allocation7] sm:$0xff]
      %v114 = vsub.f32 %v70, %v113
      %v115 = vand.u32 2147483647, %v114
      %v116 = vmin.f32 %v115, 0.2
      %vm117 = vcmp.ge.f32.partialorder %v71, 0.8
      %vm118 = vcmp.le.f32.partialorder %v71, 1.0
      %vm119 = vmand %vm117, %vm118
      %v120 = vsub.f32 %v71, 0.8
      %v121 = vmul.f32 %v120, 5.0
      %v122 = vmul.f32 %v121, -0.0099
      %v123 = vmul.f32 %v122, %v121
      %v124 = vsel %vm119, %v123, 0.0
      %v125 = vsub.f32 %v71, 1.0
      %v126 = vmax.f32 %v125, 0.0
      %v127 = vadd.f32 %v116, %v124
      %v128 = vmul.f32 %v126, %v126
      %v129 = vadd.f32 %v127, %v128
      %v130 = vlaneseq
      %v131 = vshrl.u32 %v130, 7
      %vm132 = vcmp.eq.s32.totalorder %v131, 1
      %v133 = vsel %vm132, 1.2, 1.5
      %vm134 = vcmp.eq.s32.totalorder %v131, 2
      %v135 = vsel %vm134, 1.2, %v133
      %vm136 = vcmp.eq.s32.totalorder %v131, 3
      %v137 = vsel %vm136, 0.8, %v135
      %vm138 = vcmp.eq.s32.totalorder %v131, 4
      %v139 = vsel %vm138, 0.8, %v137
      %vm140 = vcmp.eq.s32.totalorder %v131, 5
      %v141 = vsel %vm140, 0.8, %v139
      %vm142 = vcmp.eq.s32.totalorder %v131, 6
      %v143 = vsel %vm142, 0.8, %v141
      %vm144 = vcmp.eq.s32.totalorder %v131, 7
      %v145 = vsel %vm144, 0.8, %v143
      %v146 = vmul.f32 %v129, %v145
      %vm147 = vcmask 64512
      %v148 = vsel %vm147, %v146, 0.0
      %149 = vadd.xlane.f32.xlu0 %v148
      %v150 = vpop.xlane.xlu0 %149
      %v151 = vrot.slane %v150, 4
      %v152 = vadd.f32 %v150, %v151
      %v153 = vrot.slane %v152, 2
      %v154 = vadd.f32 %v152, %v153
      %v155 = vrot.slane %v154, 1
      %v156 = vadd.f32 %v154, %v155
      %v157 = vmul.f32 %v156, 0.015625
      %v158 = vsel %vm147, %v70, 0.0
      %159 = vadd.xlane.f32.xlu0 %v158
      %v160 = vpop.xlane.xlu0 %159
      %v161 = vmul.f32 %v70, %v70
      %v162 = vsel %vm147, %v161, 0.0
      %163 = vadd.xlane.f32.xlu0 %v162
      %v164 = vpop.xlane.xlu0 %163
      %v165 = vmul.f32 %v160, %v160
      %v166 = vmul.f32 %v165, 0.125
      %v167 = vsub.f32 %v164, %v166
      %v168 = vmax.f32 %v167, 0.0
      %v169 = vrcp.pop 7.0
      %v170 = vmul.f32 %v168, %v169
      %v171 = vrsqrt.pop %v170
      %v172 = vmul.f32 %v170, %v171
      %vm173 = vcmp.eq.f32.partialorder %v170, inf
      %v174 = vsel %vm173, %v170, %v172
      %vm175 = vcmp.eq.f32.partialorder %v170, 0.0
      %v176 = vand.u32 %v170, 2147483648
      %v177 = vsel %vm175, %v176, %v174
      %v178 = vrot.slane %v177, 4
      %v179 = vadd.f32 %v177, %v178
      %v180 = vrot.slane %v179, 2
      %v181 = vadd.f32 %v179, %v180
      %v182 = vrot.slane %v181, 1
      %v183 = vadd.f32 %v181, %v182
      %v184 = vmul.f32 %v183, 0.125
      %v185 = vsub.f32 0.0, %v184
      %v186 = vmul.f32 %v185, 3.3333333
      %v187 = vmul.f32 %v186, 1.442695
      %v188 = vpow.pop %v187
      %v189 = vld [vmem:[%s3] sm:$0xff]
      %v190 = vld [vmem:[#allocation9] sm:$0xff]
      %v191 = vsub.f32 %v189, %v190
      %v192 = vand.u32 2147483647, %v191
      %vm193 = vcmp.ge.f32.partialorder %v192, 0.2
      %v194 = vsel %vm193, 1.0, 0.0
      %v195 = vsel %vm147, %v194, -inf
      %196 = vmax.xlane.f32.xlu0 %v195
      %v197 = vpop.xlane.xlu0 %196
      %v198 = vrot.slane %v197, 4
      %v199 = vadd.f32 %v197, %v198
      %v200 = vrot.slane %v199, 2
      %v201 = vadd.f32 %v199, %v200
      %v202 = vrot.slane %v201, 1
      %v203 = vadd.f32 %v201, %v202
      %205 = vset.pattern.permute.xlu0 0
      %206 = vperm.xlu0 %205, %v189
      %v207 = vpop.permute.xlu0 %206
      %v209 = vlaneseq
      %v210 = vshrl.u32 %v209, 7
      %v211 = vsub.s32 0, %v210
      %v212 = vrot.slane %v70, %v211
      %v213 = vsub.f32 %v207, %v212
      %v214 = vand.u32 2147483647, %v213
      %215 = vset.pattern.permute.xlu0 1
      %216 = vperm.xlu0 %215, %v189
      %v217 = vpop.permute.xlu0 %216
      %v219 = vlaneseq
      %v220 = vshrl.u32 %v219, 7
      %v221 = vsub.s32 1, %v220
      %v222 = vrot.slane %v70, %v221
      %v223 = vsub.f32 %v217, %v222
      %v224 = vand.u32 2147483647, %v223
      %v225 = vadd.f32 %v214, %v224
      %226 = vset.pattern.permute.xlu0 2
      %227 = vperm.xlu0 %226, %v189
      %v228 = vpop.permute.xlu0 %227
      %v230 = vlaneseq
      %v231 = vshrl.u32 %v230, 7
      %v232 = vsub.s32 2, %v231
      %v233 = vrot.slane %v70, %v232
      %v234 = vsub.f32 %v228, %v233
      %v235 = vand.u32 2147483647, %v234
      %v236 = vadd.f32 %v225, %v235
      %237 = vset.pattern.permute.xlu0 3
      %238 = vperm.xlu0 %237, %v189
      %v239 = vpop.permute.xlu0 %238
      %v241 = vlaneseq
      %v242 = vshrl.u32 %v241, 7
      %v243 = vsub.s32 3, %v242
      %v244 = vrot.slane %v70, %v243
      %v245 = vsub.f32 %v239, %v244
      %v246 = vand.u32 2147483647, %v245
      %v247 = vadd.f32 %v236, %v246
      %248 = vset.pattern.permute.xlu0 4
      %249 = vperm.xlu0 %248, %v189
      %v250 = vpop.permute.xlu0 %249
      %v252 = vlaneseq
      %v253 = vshrl.u32 %v252, 7
      %v254 = vsub.s32 4, %v253
      %v255 = vrot.slane %v70, %v254
      %v256 = vsub.f32 %v250, %v255
      %v257 = vand.u32 2147483647, %v256
      %v258 = vadd.f32 %v247, %v257
      %259 = vset.pattern.permute.xlu0 5
      %260 = vperm.xlu0 %259, %v189
      %v261 = vpop.permute.xlu0 %260
      %v263 = vlaneseq
      %v264 = vshrl.u32 %v263, 7
      %v265 = vsub.s32 5, %v264
      %v266 = vrot.slane %v70, %v265
      %v267 = vsub.f32 %v261, %v266
      %v268 = vand.u32 2147483647, %v267
      %v269 = vadd.f32 %v258, %v268
      %270 = vset.pattern.permute.xlu0 6
      %271 = vperm.xlu0 %270, %v189
      %v272 = vpop.permute.xlu0 %271
      %v274 = vlaneseq
      %v275 = vshrl.u32 %v274, 7
      %v276 = vsub.s32 6, %v275
      %v277 = vrot.slane %v70, %v276
      %v278 = vsub.f32 %v272, %v277
      %v279 = vand.u32 2147483647, %v278
      %v280 = vadd.f32 %v269, %v279
      %281 = vset.pattern.permute.xlu0 7
      %282 = vperm.xlu0 %281, %v189
      %v283 = vpop.permute.xlu0 %282
      %v285 = vlaneseq
      %v286 = vshrl.u32 %v285, 7
      %v287 = vsub.s32 7, %v286
      %v288 = vrot.slane %v70, %v287
      %v289 = vsub.f32 %v283, %v288
      %v290 = vand.u32 2147483647, %v289
      %v291 = vadd.f32 %v280, %v290
      %vm292 = vcmp.lt.f32.partialorder %v291, 0.8
      %vm293 = vcmp.ge.f32.partialorder %v115, 0.2
      %v294 = vsel %vm293, 1.0, 0.0
      %v295 = vsel %vm147, %v294, -inf
      %v296 = vrot.slane %v295, 4
      %v297 = vmax.f32 %v295, %v296
      %v298 = vrot.slane %v297, 2
      %v299 = vmax.f32 %v297, %v298
      %v300 = vrot.slane %v299, 1
      %v301 = vmax.f32 %v299, %v300
      %v302 = vsel %vm292, %v301, 0.0
      %v303 = vsel %vm147, %v302, 0.0
      %304 = vadd.xlane.f32.xlu0 %v303
      %v305 = vpop.xlane.xlu0 %304
      %v306 = vsub.f32 %v305, %v197
      %v307 = vmul.f32 %v197, %v306
      %v308 = vmul.f32 %v307, 0.125
      %v309 = vmul.f32 %v308, 1.442695
      %v310 = vpow.pop %v309
      %v311 = vsub.f32 %v310, 1.0
      %v312 = vrot.slane %v311, 4
      %v313 = vadd.f32 %v311, %v312
      %v314 = vrot.slane %v313, 2
      %v315 = vadd.f32 %v313, %v314
      %v316 = vrot.slane %v315, 1
      %v317 = vadd.f32 %v315, %v316
      %v318 = vmul.f32 %v317, 0.125
      %v319 = vrot.slane %v307, 4
      %v320 = vadd.f32 %v307, %v319
      %v321 = vrot.slane %v320, 2
      %v322 = vadd.f32 %v320, %v321
      %v323 = vrot.slane %v322, 1
      %v324 = vadd.f32 %v322, %v323
      %v325 = vmax.f32 %v203, 1.0
      %v326 = vrcp.pop %v325
      %v327 = vmul.f32 %v324, %v326
      %v328 = vsub.f32 0.0, %v327
      %v329 = vmul.f32 %v328, 1.442695
      %v330 = vpow.pop %v329
      %v331 = vsub.f32 1.0, %v330
      %v332 = vmul.f32 %v331, 0.1
      %v333 = vmul.f32 %v332, %v318
      %v334 = vadd.f32 %v157, %v333
      %v335 = vstv %s69
      %v336 = vmul.f32 %v335, %v188
      %v337 = vadd.f32 %v334, %v336
      %vm338 = vcmask 0
      %339 = vst.msk [vmem:[#allocation10] sm:$0x1] %vm338, %v337
    $region45: #{tpu_custom_call.1} parent=1 // pred_fallthru
      _
    // Predicated region
    $region46: #{tpu_custom_call.1} parent=1 // pred_check
      _
    $region47: #{tpu_custom_call.1} parent=1 // pred_check_branch
      %341 = sbr.rel (0) target = $region49
    $region48: #{tpu_custom_call.1} parent=1 // pred_region
      %s343 = ssub.s32 16, 16
      %344 = vsyncadd [#allocation4], %s343
      %s346 = sshll.u32 [#allocation10], 4
      %s347 = int_to_ptr.vmem [resolvable:$true] %s346
      %349 = dma.vmem_to_hbm [thread:$0]  %s347, 16, %s5, [#allocation4]
    $region49: #{tpu_custom_call.1} parent=1 // pred_fallthru
      _
    // Predicated region
    $region50: #{tpu_custom_call.1} parent=1 // pred_check
      _
    $region51: #{tpu_custom_call.1} parent=1 // pred_check_branch
      %351 = sbr.rel (0) target = $region53
    $region52: #{tpu_custom_call.1} parent=1 // pred_region
      %352 = dma.done [#allocation4], 16
    $region53: #{tpu_custom_call.1} parent=1 // pred_fallthru
      _
    %353 = vsyncpa [#allocation3], 1
    %354 = vsyncpa [#allocation8], 1
    %355 = vsyncpa [#allocation4], 1
    %356 = vsyncpa [#allocation5], 1

</llo_original>
